<compile_context>
chip_gen: v5e
topology: v5e:2x2
jax: 0.10.0
libtpu: 0.0.40
codegen_flags: <defaults>
</compile_context>

<pallas_src>
import jax
import jax.numpy as jnp
from jax.experimental import pallas as pl
from jax.experimental.pallas import tpu as pltpu


def _make_clip_embedding_kernel(Bh, T):
    """Build the kernel for one batch-split of Bh batch elements x T tokens."""

    def kernel(tok_ref,      # SMEM (scalar prefetch): (B, T) int32 token ids
               table_hbm,    # HBM (pl.ANY): (V, D) token-embedding table
               pos_ref,      # VMEM: (T, D) positional embedding (resident)
               o_ref,        # VMEM: (Bh, T, D) output block for this split
               gather_buf,   # VMEM scratch: (Bh*T, D) gathered token rows
               sem):         # single shared DMA semaphore
        c = pl.program_id(0)
        b0 = c * Bh

        # Issue ALL row-gather DMAs for this split up front (fully unrolled:
        # Bh and T are small static constants), so they overlap each other and
        # the pipelined output writeback of the previous step.  Token-id SMEM
        # reads all happen before the first .wait().
        started = []
        for i in range(Bh):
            for t in range(T):
                tid = tok_ref[b0 + i, t]
                r = i * T + t
                pltpu.make_async_copy(
                    table_hbm.at[pl.ds(tid, 1), :],
                    gather_buf.at[pl.ds(r, 1), :],
                    sem,
                ).start()
                started.append((r, tid))

        # Wait for every row on the single shared semaphore; descriptors are
        # rebuilt with exactly the same slices that were started (all copies
        # are the same size, so completion order does not matter).
        for r, tid in started:
            pltpu.make_async_copy(
                table_hbm.at[pl.ds(tid, 1), :],
                gather_buf.at[pl.ds(r, 1), :],
                sem,
            ).wait()

        # x = token_embedding[tokens] + positional_embedding
        # One lane-dense (T, D) slab store per batch element of this split.
        for i in range(Bh):
            o_ref[i] = (gather_buf[pl.ds(i * T, T), :] + pos_ref[...]
                        ).astype(o_ref.dtype)

    return kernel


def clip_embedding_forward(tokens, token_embedding, positional_embedding):
    """tokens: (B, T) int; token_embedding: (V, D); positional_embedding: (T, D)."""
    tokens = tokens.astype(jnp.int32)
    B, T = tokens.shape
    V, D = token_embedding.shape
    assert positional_embedding.shape == (T, D)

    # Split the batch across (up to) two grid steps: on v7x the two TensorCores
    # each gather half the rows in parallel; neutral-ish on single-TC v5e/v6e.
    n_splits = 2 if (B >= 2 and B % 2 == 0) else 1
    Bh = B // n_splits

    grid_spec = pltpu.PrefetchScalarGridSpec(
        num_scalar_prefetch=1,               # token ids land in SMEM pre-grid
        grid=(n_splits,),
        in_specs=[
            pl.BlockSpec(memory_space=pl.ANY),              # table stays in HBM
            pl.BlockSpec((T, D), lambda c, tok: (0, 0)),    # pos emb VMEM-resident
        ],
        out_specs=pl.BlockSpec((Bh, T, D), lambda c, tok: (c, 0, 0)),
        scratch_shapes=[
            pltpu.VMEM((Bh * T, D), token_embedding.dtype),
            pltpu.SemaphoreType.DMA(()),      # one shared semaphore for all rows
        ],
    )

    return pl.pallas_call(
        _make_clip_embedding_kernel(Bh, T),
        out_shape=jax.ShapeDtypeStruct((B, T, D), token_embedding.dtype),
        grid_spec=grid_spec,
        compiler_params=pltpu.CompilerParams(
            # The two batch-splits are independent -> shard across v7x's 2 TCs.
            dimension_semantics=("parallel",),
        ),
    )(tokens, token_embedding, positional_embedding)


if __name__ == "__main__":
    # Small config consistent with CLIPEmbedding(n_vocab, n_embed, n_tokens).
    # D=128 keeps the output store lane-dense (real CLIP uses 512/768).
    n_vocab, n_tokens, n_embed, batch = 512, 8, 128, 2

    key = jax.random.PRNGKey(0)
    k_tab, k_pos, k_tok = jax.random.split(key, 3)
    token_embedding = jax.random.normal(k_tab, (n_vocab, n_embed), jnp.float32) * 0.02
    # (PyTorch initializes positional_embedding to zeros; random values make a
    # stronger test and the forward semantics are identical.)
    positional_embedding = jax.random.normal(k_pos, (n_tokens, n_embed), jnp.float32) * 0.02
    tokens = jax.random.randint(k_tok, (batch, n_tokens), 0, n_vocab, dtype=jnp.int32)

    out = clip_embedding_forward(tokens, token_embedding, positional_embedding)
    out = jax.block_until_ready(out)

    # Pure-JAX reference: x = token_embedding[tokens] + positional_embedding
    ref = jnp.take(token_embedding, tokens, axis=0) + positional_embedding

    assert out.shape == (batch, n_tokens, n_embed), out.shape
    max_err = float(jnp.max(jnp.abs(out - ref)))
    assert max_err < 1e-6, f"mismatch vs reference: {max_err}"
    print("KERNEL_OK")
</pallas_src>

<mosaic_0001>
module attributes {stable_mosaic.version = 11 : i64} {
  func.func @kernel(%arg0: i32, %arg1: memref<2x8xi32, #tpu.memory_space<smem>>, %arg2: memref<512x128xf32, #tpu.memory_space<any>>, %arg3: memref<8x128xf32, #tpu.memory_space<vmem>>, %arg4: memref<1x8x128xf32, #tpu.memory_space<vmem>>, %arg5: memref<8x128xf32, #tpu.memory_space<vmem>>, %arg6: memref<!tpu.dma_semaphore, #tpu.memory_space<semaphore_mem>>) attributes {dimension_semantics = [#tpu.dimension_semantics<parallel>], iteration_bounds = array<i64: 2>, scalar_prefetch = 1 : i64, scratch_operands = 2 : i64, tpu.core_type = #tpu.core_type<tc>, window_params = [{}, {pipeline_mode = #tpu.pipeline_mode<synchronous>, transform_indices = @transform_1, window_bounds = array<i64: 8, 128>}, {transform_indices = @transform_2, window_bounds = array<i64: 1, 8, 128>}]} {
    %c1_i32 = arith.constant 1 : i32
    %0 = arith.muli %arg0, %c1_i32 : i32
    %c0_i32 = arith.constant 0 : i32
    %1 = arith.addi %0, %c0_i32 : i32
    %2 = arith.index_cast %1 : i32 to index
    %c0 = arith.constant 0 : index
    %3 = memref.load %arg1[%2, %c0] : memref<2x8xi32, #tpu.memory_space<smem>>
    %c0_i32_0 = arith.constant 0 : i32
    %4 = tpu.memref_slice %arg2[%3, %c0_i32_0] : memref<512x128xf32, #tpu.memory_space<any>> -> memref<1x128xf32, #tpu.memory_space<any>>
    %c0_i32_1 = arith.constant 0 : i32
    %c0_i32_2 = arith.constant 0 : i32
    %5 = tpu.memref_slice %arg5[%c0_i32_1, %c0_i32_2] : memref<8x128xf32, #tpu.memory_space<vmem>> -> memref<1x128xf32, #tpu.memory_space<vmem>>
    tpu.enqueue_dma source(%4 : memref<1x128xf32, #tpu.memory_space<any>>) target(%5 : memref<1x128xf32, #tpu.memory_space<vmem>>) target_semaphore(%arg6 : memref<!tpu.dma_semaphore, #tpu.memory_space<semaphore_mem>>)
    %c0_i32_3 = arith.constant 0 : i32
    %6 = arith.addi %0, %c0_i32_3 : i32
    %7 = arith.index_cast %6 : i32 to index
    %c1 = arith.constant 1 : index
    %8 = memref.load %arg1[%7, %c1] : memref<2x8xi32, #tpu.memory_space<smem>>
    %c0_i32_4 = arith.constant 0 : i32
    %9 = tpu.memref_slice %arg2[%8, %c0_i32_4] : memref<512x128xf32, #tpu.memory_space<any>> -> memref<1x128xf32, #tpu.memory_space<any>>
    %c1_i32_5 = arith.constant 1 : i32
    %c0_i32_6 = arith.constant 0 : i32
    %10 = tpu.memref_slice %arg5[%c1_i32_5, %c0_i32_6] : memref<8x128xf32, #tpu.memory_space<vmem>> -> memref<1x128xf32, #tpu.memory_space<vmem>>
    tpu.enqueue_dma source(%9 : memref<1x128xf32, #tpu.memory_space<any>>) target(%10 : memref<1x128xf32, #tpu.memory_space<vmem>>) target_semaphore(%arg6 : memref<!tpu.dma_semaphore, #tpu.memory_space<semaphore_mem>>)
    %c0_i32_7 = arith.constant 0 : i32
    %11 = arith.addi %0, %c0_i32_7 : i32
    %12 = arith.index_cast %11 : i32 to index
    %c2 = arith.constant 2 : index
    %13 = memref.load %arg1[%12, %c2] : memref<2x8xi32, #tpu.memory_space<smem>>
    %c0_i32_8 = arith.constant 0 : i32
    %14 = tpu.memref_slice %arg2[%13, %c0_i32_8] : memref<512x128xf32, #tpu.memory_space<any>> -> memref<1x128xf32, #tpu.memory_space<any>>
    %c2_i32 = arith.constant 2 : i32
    %c0_i32_9 = arith.constant 0 : i32
    %15 = tpu.memref_slice %arg5[%c2_i32, %c0_i32_9] : memref<8x128xf32, #tpu.memory_space<vmem>> -> memref<1x128xf32, #tpu.memory_space<vmem>>
    tpu.enqueue_dma source(%14 : memref<1x128xf32, #tpu.memory_space<any>>) target(%15 : memref<1x128xf32, #tpu.memory_space<vmem>>) target_semaphore(%arg6 : memref<!tpu.dma_semaphore, #tpu.memory_space<semaphore_mem>>)
    %c0_i32_10 = arith.constant 0 : i32
    %16 = arith.addi %0, %c0_i32_10 : i32
    %17 = arith.index_cast %16 : i32 to index
    %c3 = arith.constant 3 : index
    %18 = memref.load %arg1[%17, %c3] : memref<2x8xi32, #tpu.memory_space<smem>>
    %c0_i32_11 = arith.constant 0 : i32
    %19 = tpu.memref_slice %arg2[%18, %c0_i32_11] : memref<512x128xf32, #tpu.memory_space<any>> -> memref<1x128xf32, #tpu.memory_space<any>>
    %c3_i32 = arith.constant 3 : i32
    %c0_i32_12 = arith.constant 0 : i32
    %20 = tpu.memref_slice %arg5[%c3_i32, %c0_i32_12] : memref<8x128xf32, #tpu.memory_space<vmem>> -> memref<1x128xf32, #tpu.memory_space<vmem>>
    tpu.enqueue_dma source(%19 : memref<1x128xf32, #tpu.memory_space<any>>) target(%20 : memref<1x128xf32, #tpu.memory_space<vmem>>) target_semaphore(%arg6 : memref<!tpu.dma_semaphore, #tpu.memory_space<semaphore_mem>>)
    %c0_i32_13 = arith.constant 0 : i32
    %21 = arith.addi %0, %c0_i32_13 : i32
    %22 = arith.index_cast %21 : i32 to index
    %c4 = arith.constant 4 : index
    %23 = memref.load %arg1[%22, %c4] : memref<2x8xi32, #tpu.memory_space<smem>>
    %c0_i32_14 = arith.constant 0 : i32
    %24 = tpu.memref_slice %arg2[%23, %c0_i32_14] : memref<512x128xf32, #tpu.memory_space<any>> -> memref<1x128xf32, #tpu.memory_space<any>>
    %c4_i32 = arith.constant 4 : i32
    %c0_i32_15 = arith.constant 0 : i32
    %25 = tpu.memref_slice %arg5[%c4_i32, %c0_i32_15] : memref<8x128xf32, #tpu.memory_space<vmem>> -> memref<1x128xf32, #tpu.memory_space<vmem>>
    tpu.enqueue_dma source(%24 : memref<1x128xf32, #tpu.memory_space<any>>) target(%25 : memref<1x128xf32, #tpu.memory_space<vmem>>) target_semaphore(%arg6 : memref<!tpu.dma_semaphore, #tpu.memory_space<semaphore_mem>>)
    %c0_i32_16 = arith.constant 0 : i32
    %26 = arith.addi %0, %c0_i32_16 : i32
    %27 = arith.index_cast %26 : i32 to index
    %c5 = arith.constant 5 : index
    %28 = memref.load %arg1[%27, %c5] : memref<2x8xi32, #tpu.memory_space<smem>>
    %c0_i32_17 = arith.constant 0 : i32
    %29 = tpu.memref_slice %arg2[%28, %c0_i32_17] : memref<512x128xf32, #tpu.memory_space<any>> -> memref<1x128xf32, #tpu.memory_space<any>>
    %c5_i32 = arith.constant 5 : i32
    %c0_i32_18 = arith.constant 0 : i32
    %30 = tpu.memref_slice %arg5[%c5_i32, %c0_i32_18] : memref<8x128xf32, #tpu.memory_space<vmem>> -> memref<1x128xf32, #tpu.memory_space<vmem>>
    tpu.enqueue_dma source(%29 : memref<1x128xf32, #tpu.memory_space<any>>) target(%30 : memref<1x128xf32, #tpu.memory_space<vmem>>) target_semaphore(%arg6 : memref<!tpu.dma_semaphore, #tpu.memory_space<semaphore_mem>>)
    %c0_i32_19 = arith.constant 0 : i32
    %31 = arith.addi %0, %c0_i32_19 : i32
    %32 = arith.index_cast %31 : i32 to index
    %c6 = arith.constant 6 : index
    %33 = memref.load %arg1[%32, %c6] : memref<2x8xi32, #tpu.memory_space<smem>>
    %c0_i32_20 = arith.constant 0 : i32
    %34 = tpu.memref_slice %arg2[%33, %c0_i32_20] : memref<512x128xf32, #tpu.memory_space<any>> -> memref<1x128xf32, #tpu.memory_space<any>>
    %c6_i32 = arith.constant 6 : i32
    %c0_i32_21 = arith.constant 0 : i32
    %35 = tpu.memref_slice %arg5[%c6_i32, %c0_i32_21] : memref<8x128xf32, #tpu.memory_space<vmem>> -> memref<1x128xf32, #tpu.memory_space<vmem>>
    tpu.enqueue_dma source(%34 : memref<1x128xf32, #tpu.memory_space<any>>) target(%35 : memref<1x128xf32, #tpu.memory_space<vmem>>) target_semaphore(%arg6 : memref<!tpu.dma_semaphore, #tpu.memory_space<semaphore_mem>>)
    %c0_i32_22 = arith.constant 0 : i32
    %36 = arith.addi %0, %c0_i32_22 : i32
    %37 = arith.index_cast %36 : i32 to index
    %c7 = arith.constant 7 : index
    %38 = memref.load %arg1[%37, %c7] : memref<2x8xi32, #tpu.memory_space<smem>>
    %c0_i32_23 = arith.constant 0 : i32
    %39 = tpu.memref_slice %arg2[%38, %c0_i32_23] : memref<512x128xf32, #tpu.memory_space<any>> -> memref<1x128xf32, #tpu.memory_space<any>>
    %c7_i32 = arith.constant 7 : i32
    %c0_i32_24 = arith.constant 0 : i32
    %40 = tpu.memref_slice %arg5[%c7_i32, %c0_i32_24] : memref<8x128xf32, #tpu.memory_space<vmem>> -> memref<1x128xf32, #tpu.memory_space<vmem>>
    tpu.enqueue_dma source(%39 : memref<1x128xf32, #tpu.memory_space<any>>) target(%40 : memref<1x128xf32, #tpu.memory_space<vmem>>) target_semaphore(%arg6 : memref<!tpu.dma_semaphore, #tpu.memory_space<semaphore_mem>>)
    %c0_i32_25 = arith.constant 0 : i32
    %41 = tpu.memref_slice %arg2[%3, %c0_i32_25] : memref<512x128xf32, #tpu.memory_space<any>> -> memref<1x128xf32, #tpu.memory_space<any>>
    %c0_i32_26 = arith.constant 0 : i32
    %c0_i32_27 = arith.constant 0 : i32
    %42 = tpu.memref_slice %arg5[%c0_i32_26, %c0_i32_27] : memref<8x128xf32, #tpu.memory_space<vmem>> -> memref<1x128xf32, #tpu.memory_space<vmem>>
    tpu.wait_dma2 semaphore(%arg6 : memref<!tpu.dma_semaphore, #tpu.memory_space<semaphore_mem>>) src(%41 : memref<1x128xf32, #tpu.memory_space<any>>) dst(%42 : memref<1x128xf32, #tpu.memory_space<vmem>>)
    %c0_i32_28 = arith.constant 0 : i32
    %43 = tpu.memref_slice %arg2[%8, %c0_i32_28] : memref<512x128xf32, #tpu.memory_space<any>> -> memref<1x128xf32, #tpu.memory_space<any>>
    %c1_i32_29 = arith.constant 1 : i32
    %c0_i32_30 = arith.constant 0 : i32
    %44 = tpu.memref_slice %arg5[%c1_i32_29, %c0_i32_30] : memref<8x128xf32, #tpu.memory_space<vmem>> -> memref<1x128xf32, #tpu.memory_space<vmem>>
    tpu.wait_dma2 semaphore(%arg6 : memref<!tpu.dma_semaphore, #tpu.memory_space<semaphore_mem>>) src(%43 : memref<1x128xf32, #tpu.memory_space<any>>) dst(%44 : memref<1x128xf32, #tpu.memory_space<vmem>>)
    %c0_i32_31 = arith.constant 0 : i32
    %45 = tpu.memref_slice %arg2[%13, %c0_i32_31] : memref<512x128xf32, #tpu.memory_space<any>> -> memref<1x128xf32, #tpu.memory_space<any>>
    %c2_i32_32 = arith.constant 2 : i32
    %c0_i32_33 = arith.constant 0 : i32
    %46 = tpu.memref_slice %arg5[%c2_i32_32, %c0_i32_33] : memref<8x128xf32, #tpu.memory_space<vmem>> -> memref<1x128xf32, #tpu.memory_space<vmem>>
    tpu.wait_dma2 semaphore(%arg6 : memref<!tpu.dma_semaphore, #tpu.memory_space<semaphore_mem>>) src(%45 : memref<1x128xf32, #tpu.memory_space<any>>) dst(%46 : memref<1x128xf32, #tpu.memory_space<vmem>>)
    %c0_i32_34 = arith.constant 0 : i32
    %47 = tpu.memref_slice %arg2[%18, %c0_i32_34] : memref<512x128xf32, #tpu.memory_space<any>> -> memref<1x128xf32, #tpu.memory_space<any>>
    %c3_i32_35 = arith.constant 3 : i32
    %c0_i32_36 = arith.constant 0 : i32
    %48 = tpu.memref_slice %arg5[%c3_i32_35, %c0_i32_36] : memref<8x128xf32, #tpu.memory_space<vmem>> -> memref<1x128xf32, #tpu.memory_space<vmem>>
    tpu.wait_dma2 semaphore(%arg6 : memref<!tpu.dma_semaphore, #tpu.memory_space<semaphore_mem>>) src(%47 : memref<1x128xf32, #tpu.memory_space<any>>) dst(%48 : memref<1x128xf32, #tpu.memory_space<vmem>>)
    %c0_i32_37 = arith.constant 0 : i32
    %49 = tpu.memref_slice %arg2[%23, %c0_i32_37] : memref<512x128xf32, #tpu.memory_space<any>> -> memref<1x128xf32, #tpu.memory_space<any>>
    %c4_i32_38 = arith.constant 4 : i32
    %c0_i32_39 = arith.constant 0 : i32
    %50 = tpu.memref_slice %arg5[%c4_i32_38, %c0_i32_39] : memref<8x128xf32, #tpu.memory_space<vmem>> -> memref<1x128xf32, #tpu.memory_space<vmem>>
    tpu.wait_dma2 semaphore(%arg6 : memref<!tpu.dma_semaphore, #tpu.memory_space<semaphore_mem>>) src(%49 : memref<1x128xf32, #tpu.memory_space<any>>) dst(%50 : memref<1x128xf32, #tpu.memory_space<vmem>>)
    %c0_i32_40 = arith.constant 0 : i32
    %51 = tpu.memref_slice %arg2[%28, %c0_i32_40] : memref<512x128xf32, #tpu.memory_space<any>> -> memref<1x128xf32, #tpu.memory_space<any>>
    %c5_i32_41 = arith.constant 5 : i32
    %c0_i32_42 = arith.constant 0 : i32
    %52 = tpu.memref_slice %arg5[%c5_i32_41, %c0_i32_42] : memref<8x128xf32, #tpu.memory_space<vmem>> -> memref<1x128xf32, #tpu.memory_space<vmem>>
    tpu.wait_dma2 semaphore(%arg6 : memref<!tpu.dma_semaphore, #tpu.memory_space<semaphore_mem>>) src(%51 : memref<1x128xf32, #tpu.memory_space<any>>) dst(%52 : memref<1x128xf32, #tpu.memory_space<vmem>>)
    %c0_i32_43 = arith.constant 0 : i32
    %53 = tpu.memref_slice %arg2[%33, %c0_i32_43] : memref<512x128xf32, #tpu.memory_space<any>> -> memref<1x128xf32, #tpu.memory_space<any>>
    %c6_i32_44 = arith.constant 6 : i32
    %c0_i32_45 = arith.constant 0 : i32
    %54 = tpu.memref_slice %arg5[%c6_i32_44, %c0_i32_45] : memref<8x128xf32, #tpu.memory_space<vmem>> -> memref<1x128xf32, #tpu.memory_space<vmem>>
    tpu.wait_dma2 semaphore(%arg6 : memref<!tpu.dma_semaphore, #tpu.memory_space<semaphore_mem>>) src(%53 : memref<1x128xf32, #tpu.memory_space<any>>) dst(%54 : memref<1x128xf32, #tpu.memory_space<vmem>>)
    %c0_i32_46 = arith.constant 0 : i32
    %55 = tpu.memref_slice %arg2[%38, %c0_i32_46] : memref<512x128xf32, #tpu.memory_space<any>> -> memref<1x128xf32, #tpu.memory_space<any>>
    %c7_i32_47 = arith.constant 7 : i32
    %c0_i32_48 = arith.constant 0 : i32
    %56 = tpu.memref_slice %arg5[%c7_i32_47, %c0_i32_48] : memref<8x128xf32, #tpu.memory_space<vmem>> -> memref<1x128xf32, #tpu.memory_space<vmem>>
    tpu.wait_dma2 semaphore(%arg6 : memref<!tpu.dma_semaphore, #tpu.memory_space<semaphore_mem>>) src(%55 : memref<1x128xf32, #tpu.memory_space<any>>) dst(%56 : memref<1x128xf32, #tpu.memory_space<vmem>>)
    %c0_49 = arith.constant 0 : index
    %c0_50 = arith.constant 0 : index
    %57 = vector.load %arg5[%c0_49, %c0_50] : memref<8x128xf32, #tpu.memory_space<vmem>>, vector<8x128xf32>
    %c0_51 = arith.constant 0 : index
    %c0_52 = arith.constant 0 : index
    %58 = vector.load %arg3[%c0_51, %c0_52] : memref<8x128xf32, #tpu.memory_space<vmem>>, vector<8x128xf32>
    %59 = arith.addf %57, %58 : vector<8x128xf32>
    %c0_53 = arith.constant 0 : index
    %c0_54 = arith.constant 0 : index
    %c0_55 = arith.constant 0 : index
    %60 = vector.load %arg4[%c0_53, %c0_54, %c0_55] : memref<1x8x128xf32, #tpu.memory_space<vmem>>, vector<1x8x128xf32>
    %61 = vector.shape_cast %60 : vector<1x8x128xf32> to vector<8x128xf32>
    %62 = vector.shape_cast %59 : vector<8x128xf32> to vector<1x8x128xf32>
    tpu.vector_store %arg4[%c0_53, %c0_54, %c0_55], %62 {strides = array<i32>} : memref<1x8x128xf32, #tpu.memory_space<vmem>>, vector<1x8x128xf32>,
    return
  }
  func.func @transform_1(%arg0: i32, %arg1: memref<2x8xi32, #tpu.memory_space<smem>>) -> (i32, i32) {
    %c0_i32 = arith.constant 0 : i32
    %c0_i32_0 = arith.constant 0 : i32
    %c0_i32_1 = arith.constant 0 : i32
    return %c0_i32, %c0_i32_0 : i32, i32
  }
  func.func @transform_2(%arg0: i32, %arg1: memref<2x8xi32, #tpu.memory_space<smem>>) -> (i32, i32, i32) {
    %c0_i32 = arith.constant 0 : i32
    %c0_i32_0 = arith.constant 0 : i32
    %c0_i32_1 = arith.constant 0 : i32
    return %arg0, %c0_i32, %c0_i32_0 : i32, i32, i32
  }
}

</mosaic_0001>

<llo_original>
// kernel: tpu_custom_call.1
$region0: #{tpu_custom_call.1}
  #allocation0 [shape = 'u32[]', space=smem, size = 0x4, offset = 0x4, fixed_abs, tag = 'smem constant byte address 0x4 - core index']
  #allocation1 [shape = 'u32[72,128]{1,0:T(1,128)}', space=vmem, size = 0x9000, scoped, tag = 'internal scratch']
  #allocation2 [shape = 'f32[8,128]{1,0:T(8,128)}', space=vmem, size = 0x1000, scoped, tag = 'scratch operand']
  #allocation3 [shape = 's32[1]{0}', space=sflag, size = 0x4, scoped, tag = 'scratch operand']
  #allocation4 [shape = 's32[1]{0}', space=sflag, size = 0x4, scoped, tag = 'scoped memory for tpu_custom_call.1']
  #allocation5 [shape = 'u8[1024]{0}', space=smem, size = 0x400, scoped, tag = 'prefetched SMEM operand 0']
  #allocation10 [shape = 's32[]', space=sflag, size = 0x4, offset = 0, fixed_abs, tag = 'sflag constant byte address 0x0 - dummy sync flag']
  #allocation11 [shape = 's32[]', space=sflag, size = 0x4, offset = 0, fixed_abs, tag = 'sflag constant byte address 0x0 - dummy sync flag']
  #allocation12 [shape = 'u32[]', space=smem, size = 0x4, offset = 0x44, fixed_abs, tag = 'smem constant byte address 0x44 - assertion arg 0']
  #allocation13 [shape = 'u32[]', space=smem, size = 0x4, offset = 0x48, fixed_abs, tag = 'smem constant byte address 0x48 - assertion arg 1']
  #allocation14 [shape = 's32[]', space=sflag, size = 0x4, offset = 0, fixed_abs, tag = 'sflag constant byte address 0x0 - dummy sync flag']
  #allocation15 [shape = 's32[]', space=sflag, size = 0x4, offset = 0, fixed_abs, tag = 'sflag constant byte address 0x0 - dummy sync flag']
  #allocation16 [shape = 's32[]', space=sflag, size = 0x4, offset = 0, fixed_abs, tag = 'sflag constant byte address 0x0 - dummy sync flag']
  #allocation17 [shape = 's32[]', space=sflag, size = 0x4, offset = 0, fixed_abs, tag = 'sflag constant byte address 0x0 - dummy sync flag']
  #allocation18 [shape = 's32[]', space=sflag, size = 0x4, offset = 0, fixed_abs, tag = 'sflag constant byte address 0x0 - dummy sync flag']
  #allocation19 [shape = 's32[]', space=sflag, size = 0x4, offset = 0, fixed_abs, tag = 'sflag constant byte address 0x0 - dummy sync flag']
  #allocation20 [shape = 's32[]', space=sflag, size = 0x4, offset = 0, fixed_abs, tag = 'sflag constant byte address 0x0 - dummy sync flag']
  #allocation21 [shape = 's32[]', space=sflag, size = 0x4, offset = 0, fixed_abs, tag = 'sflag constant byte address 0x0 - dummy sync flag']
  #allocation22 [shape = 's32[]', space=sflag, size = 0x4, offset = 0, fixed_abs, tag = 'sflag constant byte address 0x0 - dummy sync flag']
  #allocation23 [shape = 's32[]', space=sflag, size = 0x4, offset = 0, fixed_abs, tag = 'sflag constant byte address 0x0 - dummy sync flag']
  #allocation24 [shape = 's32[]', space=sflag, size = 0x4, offset = 0, fixed_abs, tag = 'sflag constant byte address 0x0 - dummy sync flag']
  #allocation25 [shape = 's32[]', space=sflag, size = 0x4, offset = 0, fixed_abs, tag = 'sflag constant byte address 0x0 - dummy sync flag']
  #allocation26 [shape = 's32[]', space=sflag, size = 0x4, offset = 0, fixed_abs, tag = 'sflag constant byte address 0x0 - dummy sync flag']
  #allocation27 [shape = 's32[]', space=sflag, size = 0x4, offset = 0, fixed_abs, tag = 'sflag constant byte address 0x0 - dummy sync flag']
  %s0 = inlined_call_operand.hbm [shape: s32[2,8], index: 0, kind: input, shape index: {}]
  %s1 = inlined_call_operand.hbm [shape: f32[512,128], index: 1, kind: input, shape index: {}]
  %s2 = inlined_call_operand.hbm [shape: f32[8,128], index: 2, kind: input, shape index: {}]
  %s3 = inlined_call_operand.hbm [shape: f32[2,8,128], index: 3, kind: output, shape index: {}]
  %s4 = sld [smem:[#allocation0]]
  $region73: #{tpu_custom_call.1} parent=0
    _
  %s6 = ssub.s32 1, %s4
  %s7 = scalar_select 0, %s6, %s4
  %s9 = sshll.u32 %s0, 4
  %s10 = int_to_ptr.hbm [resolvable:$true] %s9
  %12 = dma.hbm_to_smem %s10, 32, [#allocation5], [#allocation4]
  %14 = dma.done [#allocation4], 32
  %15 = sfence
  $region1: #{tpu_custom_call.1} parent=0
    #allocation6 [shape = 'u8[4096]{0}', space=vmem, size = 0x1000, scoped, tag = 'input window, operand 2, single buffered']
    #allocation7 [shape = 's32[2]{0}', space=sflag, size = 0x8, scoped, tag = 'scoped memory for tpu_custom_call.1']
    #allocation8 [shape = 's32[2]{0}', space=sflag, size = 0x8, scoped, tag = 'scoped memory for tpu_custom_call.1']
    #allocation9 [shape = 'u8[8192]{0}', space=vmem, size = 0x2000, scoped, tag = 'output window, operand 0']
    %16 = vsyncpa [#allocation7], 0
    %17 = vsyncpa [#allocation8], 0
    %s18 = scalar_lea.sflag [#allocation8], 1
    %19 = vsyncpa %s18, 0
    loop: start=0, step=1, limit=4
    $region2: #{tpu_custom_call.1} parent=1 // loop_pre_header
      _
    $region3: #{tpu_custom_call.1} parent=1 // loop_header
      %s21 = sphi 0, %s25
      %p22 = scmp.ge.s32.totalorder %s21, 4
      %s29 = sphi 0, %s29
      %s31 = sphi 0, %s29
      %s32 = sphi 0, %s31
      %s46 = sphi 0, %s32
      %s52 = sphi 0, %s54
      %s55 = sphi 0, %s52
      %s56 = sphi 0, %s55
      %s72 = sphi 0, %s56
    $region4: #{tpu_custom_call.1} parent=1 // loop_header_branch
      %24 = sbr.rel (%p22) target = $region8
    $region5: #{tpu_custom_call.1} parent=1 // loop_body
      %s26 = ssub.s32 %s21, 1
      %s27 = ssub.s32 %s21, 2
      %s28 = sadd.s32 %s21, 1
      %s30 = sadd.s32 %s29, 1
      %p33 = scmp.eq.s32.totalorder %s21, 1
      %p34 = scmp.ne.s32.totalorder %s29, %s31
      %p35 = scmp.eq.s32.totalorder %s21, 0
      %p36 = por %p34, %p35
      %p37 = scmp.ne.s32.totalorder %s29, %s31
      %p38 = scmp.eq.s32.totalorder %s26, 1
      %p39 = por %p37, %p38
      %p40 = scmp.ne.s32.totalorder %s31, %s32
      %p41 = scmp.eq.s32.totalorder %s26, 0
      %p42 = por %p40, %p41
      %p43 = scmp.ne.s32.totalorder %s31, %s32
      %p44 = scmp.eq.s32.totalorder %s27, 1
      %p45 = por %p43, %p44
      %p47 = scmp.ne.s32.totalorder %s32, %s46
      %p48 = scmp.eq.s32.totalorder %s27, 0
      %p49 = por %p47, %p48
      %s50 = ssub.s32 %s21, %s28
      %p51 = scmp.eq.s32.totalorder %s50, 0
      %s53 = sadd.s32 %s52, 1
      %s54 = scalar_select %p51, %s52, %s53
      %p57 = pneg %p51
      %p58 = scmp.eq.s32.totalorder %s21, 1
      %p59 = por %p57, %p58
      %p60 = scmp.ne.s32.totalorder %s52, %s55
      %p61 = scmp.eq.s32.totalorder %s21, 0
      %p62 = por %p60, %p61
      %p63 = scmp.ne.s32.totalorder %s52, %s55
      %p64 = scmp.eq.s32.totalorder %s26, 1
      %p65 = por %p63, %p64
      %p66 = scmp.ne.s32.totalorder %s55, %s56
      %p67 = scmp.eq.s32.totalorder %s26, 0
      %p68 = por %p66, %p67
      %p69 = scmp.ne.s32.totalorder %s55, %s56
      %p70 = scmp.eq.s32.totalorder %s27, 1
      %p71 = por %p69, %p70
      %p73 = scmp.ne.s32.totalorder %s56, %s72
      %p74 = scmp.eq.s32.totalorder %s27, 0
      %p75 = por %p73, %p74
      %p76 = scmp.le.s32.totalorder 1, %s21
      %p77 = scmp.lt.s32.totalorder %s21, 3
      %p78 = pnand %p76, %p77
      %p79 = pneg %p78
      // Predicated region
      $region9: #{tpu_custom_call.1} parent=5 // pred_check
        _
      $region10: #{tpu_custom_call.1} parent=5 // pred_check_branch
        %81 = sbr.rel (%p78) target = $region12
      $region11: #{tpu_custom_call.1} parent=5 // pred_region
        %s82 = ssub.s32 %s21, 1
        // Predicated region
        $region13: #{tpu_custom_call.1} parent=11 // pred_check
          %p83 = pneg %p42
        $region14: #{tpu_custom_call.1} parent=11 // pred_check_branch
          %85 = sbr.rel (%p83) target = $region16
        $region15: #{tpu_custom_call.1} parent=11 // pred_region
          %87 = vsyncadd [#allocation7], 0
          %s89 = sshll.u32 %s2, 4
          %s90 = int_to_ptr.hbm [resolvable:$true] %s89
          %s91 = sshll.u32 [#allocation6], 4
          %s92 = int_to_ptr.vmem [resolvable:$true] %s91
          %94 = dma.hbm_to_vmem [thread:$0]  %s90, 128, %s92, [#allocation7]
        $region16: #{tpu_custom_call.1} parent=11 // pred_fallthru
          _
      $region12: #{tpu_custom_call.1} parent=5 // pred_fallthru
        _
      %p95 = scmp.lt.s32.totalorder %s21, 2
      // Predicated region
      $region17: #{tpu_custom_call.1} parent=5 // pred_check
        %p96 = pneg %p95
      $region18: #{tpu_custom_call.1} parent=5 // pred_check_branch
        %98 = sbr.rel (%p96) target = $region20
      $region19: #{tpu_custom_call.1} parent=5 // pred_region
        _
      $region20: #{tpu_custom_call.1} parent=5 // pred_fallthru
        _
      %p99 = scmp.le.s32.totalorder 1, %s21
      %p100 = scmp.lt.s32.totalorder %s21, 3
      %p101 = pnand %p99, %p100
      %p102 = pneg %p101
      // Predicated region
      $region21: #{tpu_custom_call.1} parent=5 // pred_check
        _
      $region22: #{tpu_custom_call.1} parent=5 // pred_check_branch
        %104 = sbr.rel (%p101) target = $region24
      $region23: #{tpu_custom_call.1} parent=5 // pred_region
        %s105 = ssub.s32 %s21, 1
        // Predicated region
        $region25: #{tpu_custom_call.1} parent=23 // pred_check
          %p106 = pneg %p42
        $region26: #{tpu_custom_call.1} parent=23 // pred_check_branch
          %108 = sbr.rel (%p106) target = $region28
        $region27: #{tpu_custom_call.1} parent=23 // pred_region
          %110 = dma.done [#allocation7], 128
        $region28: #{tpu_custom_call.1} parent=23 // pred_fallthru
          _
        %p111 = pneg %p42
        %p112 = pneg %p39
        %p113 = pneg %p68
        %p114 = pneg %p65
        %s115 = sand.u32 %s55, 1
        %s116 = scalar_lea.sflag [#allocation8], %s115
        %s117 = sand.u32 %s55, 1
        %s118 = smul.addr %s117, 8
        %s119 = scalar_lea.vmem [#allocation9], %s118
        %s120 = smul.u32 %s26, 128
        %s121 = sld [smem:[#allocation5 + %s120]]
        %s122 = scalar_lea.hbm %s1, %s121
        // Predicated region
        $region29: #{tpu_custom_call.1} parent=23 // pred_check
          _
        $region30: #{tpu_custom_call.1} parent=23 // pred_check_branch
          %124 = sbr.rel target = $region32
        $region31: #{tpu_custom_call.1} parent=23 // pred_region
          %125 = sst [smem:[#allocation12]] [#allocation11]
          %126 = sst [smem:[#allocation13]] [#allocation10]
        $region32: #{tpu_custom_call.1} parent=23 // pred_fallthru
          _
        %128 = shalt.err (0)
        %s130 = sshll.u32 %s122, 4
        %s131 = int_to_ptr.hbm [resolvable:$true] %s130
        %s132 = sshll.u32 [#allocation2], 4
        %s133 = int_to_ptr.vmem [resolvable:$true] %s132
        %135 = dma.hbm_to_vmem [thread:$0]  %s131, 16, %s133, [#allocation3]
        %s136 = sadd.s32 %s120, 1
        %s137 = sld [smem:[#allocation5 + %s136]]
        %s138 = scalar_lea.hbm %s1, %s137
        %s139 = scalar_lea.vmem [#allocation2], 1
        // Predicated region
        $region33: #{tpu_custom_call.1} parent=23 // pred_check
          _
        $region34: #{tpu_custom_call.1} parent=23 // pred_check_branch
          %141 = sbr.rel target = $region36
        $region35: #{tpu_custom_call.1} parent=23 // pred_region
          %142 = sst [smem:[#allocation12]] [#allocation15]
          %143 = sst [smem:[#allocation13]] [#allocation14]
        $region36: #{tpu_custom_call.1} parent=23 // pred_fallthru
          _
        %145 = shalt.err (0)
        %s147 = sshll.u32 %s138, 4
        %s148 = int_to_ptr.hbm [resolvable:$true] %s147
        %s149 = sshll.u32 %s139, 4
        %s150 = int_to_ptr.vmem [resolvable:$true] %s149
        %152 = dma.hbm_to_vmem [thread:$0]  %s148, 16, %s150, [#allocation3]
        %s153 = sadd.s32 %s120, 2
        %s154 = sld [smem:[#allocation5 + %s153]]
        %s155 = scalar_lea.hbm %s1, %s154
        %s156 = scalar_lea.vmem [#allocation2], 2
        // Predicated region
        $region37: #{tpu_custom_call.1} parent=23 // pred_check
          _
        $region38: #{tpu_custom_call.1} parent=23 // pred_check_branch
          %158 = sbr.rel target = $region40
        $region39: #{tpu_custom_call.1} parent=23 // pred_region
          %159 = sst [smem:[#allocation12]] [#allocation17]
          %160 = sst [smem:[#allocation13]] [#allocation16]
        $region40: #{tpu_custom_call.1} parent=23 // pred_fallthru
          _
        %162 = shalt.err (0)
        %s164 = sshll.u32 %s155, 4
        %s165 = int_to_ptr.hbm [resolvable:$true] %s164
        %s166 = sshll.u32 %s156, 4
        %s167 = int_to_ptr.vmem [resolvable:$true] %s166
        %169 = dma.hbm_to_vmem [thread:$0]  %s165, 16, %s167, [#allocation3]
        %s170 = sadd.s32 %s120, 3
        %s171 = sld [smem:[#allocation5 + %s170]]
        %s172 = scalar_lea.hbm %s1, %s171
        %s173 = scalar_lea.vmem [#allocation2], 3
        // Predicated region
        $region41: #{tpu_custom_call.1} parent=23 // pred_check
          _
        $region42: #{tpu_custom_call.1} parent=23 // pred_check_branch
          %175 = sbr.rel target = $region44
        $region43: #{tpu_custom_call.1} parent=23 // pred_region
          %176 = sst [smem:[#allocation12]] [#allocation19]
          %177 = sst [smem:[#allocation13]] [#allocation18]
        $region44: #{tpu_custom_call.1} parent=23 // pred_fallthru
          _
        %179 = shalt.err (0)
        %s181 = sshll.u32 %s172, 4
        %s182 = int_to_ptr.hbm [resolvable:$true] %s181
        %s183 = sshll.u32 %s173, 4
        %s184 = int_to_ptr.vmem [resolvable:$true] %s183
        %186 = dma.hbm_to_vmem [thread:$0]  %s182, 16, %s184, [#allocation3]
        %s187 = sadd.s32 %s120, 4
        %s188 = sld [smem:[#allocation5 + %s187]]
        %s189 = scalar_lea.hbm %s1, %s188
        %s190 = scalar_lea.vmem [#allocation2], 4
        // Predicated region
        $region45: #{tpu_custom_call.1} parent=23 // pred_check
          _
        $region46: #{tpu_custom_call.1} parent=23 // pred_check_branch
          %192 = sbr.rel target = $region48
        $region47: #{tpu_custom_call.1} parent=23 // pred_region
          %193 = sst [smem:[#allocation12]] [#allocation21]
          %194 = sst [smem:[#allocation13]] [#allocation20]
        $region48: #{tpu_custom_call.1} parent=23 // pred_fallthru
          _
        %196 = shalt.err (0)
        %s198 = sshll.u32 %s189, 4
        %s199 = int_to_ptr.hbm [resolvable:$true] %s198
        %s200 = sshll.u32 %s190, 4
        %s201 = int_to_ptr.vmem [resolvable:$true] %s200
        %203 = dma.hbm_to_vmem [thread:$0]  %s199, 16, %s201, [#allocation3]
        %s204 = sadd.s32 %s120, 5
        %s205 = sld [smem:[#allocation5 + %s204]]
        %s206 = scalar_lea.hbm %s1, %s205
        %s207 = scalar_lea.vmem [#allocation2], 5
        // Predicated region
        $region49: #{tpu_custom_call.1} parent=23 // pred_check
          _
        $region50: #{tpu_custom_call.1} parent=23 // pred_check_branch
          %209 = sbr.rel target = $region52
        $region51: #{tpu_custom_call.1} parent=23 // pred_region
          %210 = sst [smem:[#allocation12]] [#allocation23]
          %211 = sst [smem:[#allocation13]] [#allocation22]
        $region52: #{tpu_custom_call.1} parent=23 // pred_fallthru
          _
        %213 = shalt.err (0)
        %s215 = sshll.u32 %s206, 4
        %s216 = int_to_ptr.hbm [resolvable:$true] %s215
        %s217 = sshll.u32 %s207, 4
        %s218 = int_to_ptr.vmem [resolvable:$true] %s217
        %220 = dma.hbm_to_vmem [thread:$0]  %s216, 16, %s218, [#allocation3]
        %s221 = sadd.s32 %s120, 6
        %s222 = sld [smem:[#allocation5 + %s221]]
        %s223 = scalar_lea.hbm %s1, %s222
        %s224 = scalar_lea.vmem [#allocation2], 6
        // Predicated region
        $region53: #{tpu_custom_call.1} parent=23 // pred_check
          _
        $region54: #{tpu_custom_call.1} parent=23 // pred_check_branch
          %226 = sbr.rel target = $region56
        $region55: #{tpu_custom_call.1} parent=23 // pred_region
          %227 = sst [smem:[#allocation12]] [#allocation25]
          %228 = sst [smem:[#allocation13]] [#allocation24]
        $region56: #{tpu_custom_call.1} parent=23 // pred_fallthru
          _
        %230 = shalt.err (0)
        %s232 = sshll.u32 %s223, 4
        %s233 = int_to_ptr.hbm [resolvable:$true] %s232
        %s234 = sshll.u32 %s224, 4
        %s235 = int_to_ptr.vmem [resolvable:$true] %s234
        %237 = dma.hbm_to_vmem [thread:$0]  %s233, 16, %s235, [#allocation3]
        %s238 = sadd.s32 %s120, 7
        %s239 = sld [smem:[#allocation5 + %s238]]
        %s240 = scalar_lea.hbm %s1, %s239
        %s241 = scalar_lea.vmem [#allocation2], 7
        // Predicated region
        $region57: #{tpu_custom_call.1} parent=23 // pred_check
          _
        $region58: #{tpu_custom_call.1} parent=23 // pred_check_branch
          %243 = sbr.rel target = $region60
        $region59: #{tpu_custom_call.1} parent=23 // pred_region
          %244 = sst [smem:[#allocation12]] [#allocation27]
          %245 = sst [smem:[#allocation13]] [#allocation26]
        $region60: #{tpu_custom_call.1} parent=23 // pred_fallthru
          _
        %247 = shalt.err (0)
        %s249 = sshll.u32 %s240, 4
        %s250 = int_to_ptr.hbm [resolvable:$true] %s249
        %s251 = sshll.u32 %s241, 4
        %s252 = int_to_ptr.vmem [resolvable:$true] %s251
        %254 = dma.hbm_to_vmem [thread:$0]  %s250, 16, %s252, [#allocation3]
        %s255 = smul.u32 1, 1
        %s256 = sshll.u32 %s255, 4
        %257 = dma.done [#allocation3], %s256
        %s258 = sshll.u32 %s255, 4
        %259 = dma.done [#allocation3], %s258
        %s260 = sshll.u32 %s255, 4
        %261 = dma.done [#allocation3], %s260
        %s262 = sshll.u32 %s255, 4
        %263 = dma.done [#allocation3], %s262
        %s264 = sshll.u32 %s255, 4
        %265 = dma.done [#allocation3], %s264
        %s266 = sshll.u32 %s255, 4
        %267 = dma.done [#allocation3], %s266
        %s268 = sshll.u32 %s255, 4
        %269 = dma.done [#allocation3], %s268
        %s270 = sshll.u32 %s255, 4
        %271 = dma.done [#allocation3], %s270
        %v272 = vld [vmem:[#allocation2] sm:$0xff]
        %v273 = vld [vmem:[#allocation6] sm:$0xff]
        %v274 = vadd.f32 %v272, %v273
        %275 = vst [vmem:[%s119] sm:$0xff] %v274
        %s276 = sand.u32 %s55, 1
        %s277 = scalar_lea.sflag [#allocation8], %s276
        %s278 = sand.u32 %s55, 1
        %s279 = smul.addr %s278, 8
        %s280 = scalar_lea.vmem [#allocation9], %s279
        // Predicated region
        $region61: #{tpu_custom_call.1} parent=23 // pred_check
          %p281 = pneg %p65
        $region62: #{tpu_custom_call.1} parent=23 // pred_check_branch
          %283 = sbr.rel (%p281) target = $region64
        $region63: #{tpu_custom_call.1} parent=23 // pred_region
          %285 = vsyncadd %s277, 0
          %s286 = smul.addr %s26, 8
          %s287 = scalar_lea.hbm %s3, %s286
          %s289 = sshll.u32 %s280, 4
          %s290 = int_to_ptr.vmem [resolvable:$true] %s289
          %s291 = sshll.u32 %s287, 4
          %s292 = int_to_ptr.hbm [resolvable:$true] %s291
          %294 = dma.vmem_to_hbm [thread:$0]  %s290, 128, %s292, %s277
        $region64: #{tpu_custom_call.1} parent=23 // pred_fallthru
          _
      $region24: #{tpu_custom_call.1} parent=5 // pred_fallthru
        _
      %p295 = scmp.le.s32.totalorder 2, %s21
      // Predicated region
      $region65: #{tpu_custom_call.1} parent=5 // pred_check
        %p296 = pneg %p295
      $region66: #{tpu_custom_call.1} parent=5 // pred_check_branch
        %298 = sbr.rel (%p296) target = $region68
      $region67: #{tpu_custom_call.1} parent=5 // pred_region
        %s299 = ssub.s32 %s21, 2
        // Predicated region
        $region69: #{tpu_custom_call.1} parent=67 // pred_check
          %p300 = pneg %p71
        $region70: #{tpu_custom_call.1} parent=67 // pred_check_branch
          %302 = sbr.rel (%p300) target = $region72
        $region71: #{tpu_custom_call.1} parent=67 // pred_region
          %s303 = sand.u32 %s56, 1
          %s304 = scalar_lea.sflag [#allocation8], %s303
          %s305 = sand.u32 %s56, 1
          %s306 = smul.addr %s305, 8
          %s307 = scalar_lea.vmem [#allocation9], %s306
          %309 = dma.done %s304, 128
        $region72: #{tpu_custom_call.1} parent=67 // pred_fallthru
          _
      $region68: #{tpu_custom_call.1} parent=5 // pred_fallthru
        _
    $region6: #{tpu_custom_call.1} parent=1 // loop_footer
      %s25 = sadd.s32 1, %s21
    $region7: #{tpu_custom_call.1} parent=1 // loop_footer_branch
      %20 = sbr.rel target = $region3
    $region8: #{tpu_custom_call.1} parent=1 // loop_exit
      _
    %310 = vsyncpa [#allocation7], 1
    %s311 = scalar_lea.sflag [#allocation7], 1
    %312 = vsyncpa %s311, 1
    %313 = vsyncpa [#allocation8], 1
    %s314 = scalar_lea.sflag [#allocation8], 1
    %315 = vsyncpa %s314, 1
  %316 = vsyncmov [#allocation3]
  %s317 = vpop.sfrf %316
  %p318 = scmp.eq.s32.totalorder %s317, 0
  %p319 = pneg %p318
  %321 = shalt.err (%p319)

</llo_original>
